<compile_context>
chip_gen: v7x
topology: tpu7x:2x2x1
jax: 0.10.0
libtpu: 0.0.40
codegen_flags: <defaults>
</compile_context>

<pallas_src>
import math
import functools

import jax
import jax.numpy as jnp
from jax import lax
from jax.experimental import pallas as pl
from jax.experimental.pallas import tpu as pltpu


_INV_SQRT2 = 1.0 / math.sqrt(2.0)


# -----------------------------------------------------------------------------
# Pallas kernel: K-blocked (weight @ patches) -> +bias -> exact GELU
# -----------------------------------------------------------------------------
def _conv3d_gemm_gelu_kernel(w_ref, p_ref, b_ref, o_ref, acc_ref):
    # w_ref:  (TCo, TK) bf16 weight tile
    # p_ref:  (TK, TM)  bf16 patch tile (M = flattened output positions, lanes)
    # b_ref:  (TCo, 1)  f32 bias tile
    # o_ref:  (TCo, TM) f32 output tile (resident across the K grid axis)
    # acc_ref:(TCo, TM) f32 VMEM accumulator
    @pl.when(pl.program_id(2) == 0)
    def _init():
        acc_ref[...] = jnp.zeros_like(acc_ref)

    acc_ref[...] += jnp.dot(w_ref[...], p_ref[...],
                            preferred_element_type=jnp.float32)

    @pl.when(pl.program_id(2) == pl.num_programs(2) - 1)
    def _finish():
        z = acc_ref[...] + b_ref[...]
        # exact GELU (erf form), f32 math — matches torch.nn.functional.gelu /
        # HF ACT2FN["gelu"].
        o_ref[...] = (0.5 * z * (1.0 + lax.erf(z * _INV_SQRT2))
                      ).astype(o_ref.dtype)


def _round_up(x, m):
    return ((x + m - 1) // m) * m


def _extract_patches_kxm(x, kernel, stride):
    """im2col for 3D valid/strided conv, NCDHW input.  Returns (K, M) with K
    ordered as (C_in, kD, kH, kW) row-major — identical to flattening the
    PyTorch Conv3d weight (C_out, C_in, kD, kH, kW) over its trailing dims —
    and M ordered as (N, Do, Ho, Wo) row-major."""
    N, C, D, H, W = x.shape
    kd, kh, kw = kernel
    sd, sh, sw = stride
    Do = (D - kd) // sd + 1
    Ho = (H - kh) // sh + 1
    Wo = (W - kw) // sw + 1
    cols = []
    for c in range(C):
        for dz in range(kd):
            for dy in range(kh):
                for dx in range(kw):
                    patch = x[:, c,
                              dz:dz + sd * Do:sd,
                              dy:dy + sh * Ho:sh,
                              dx:dx + sw * Wo:sw]          # (N, Do, Ho, Wo)
                    cols.append(patch)
    patches = jnp.stack(cols, axis=0)                      # (K, N, Do, Ho, Wo)
    return patches.reshape(len(cols), -1), (Do, Ho, Wo)


@functools.partial(jax.jit, static_argnames=("kernel", "stride"))
def sign2vec_conv_layer_forward(x, weight, bias, *, kernel, stride):
    """Forward of Sign2VecNoLayerNormConvLayer: Conv3d(valid, strided) + GELU.

    x:      (N, C_in, D, H, W)  float32 (NCDHW, like PyTorch)
    weight: (C_out, C_in, kD, kH, kW)
    bias:   (C_out,)
    returns (N, C_out, D_out, H_out, W_out) float32
    """
    N, C_in, D, H, W = x.shape
    C_out = weight.shape[0]

    # im2col in bf16 (halves HBM traffic of the kD*kH*kW-inflated patch matrix).
    patches, (Do, Ho, Wo) = _extract_patches_kxm(
        x.astype(jnp.bfloat16), kernel, stride)
    K, M = patches.shape

    # Tiling:
    #   C_out -> sublanes (pad to 8), M -> lanes (pad to 128, lane-dense out),
    #   K -> single block (round to 8) when small, else 512-wide reduction.
    TCo = min(256, _round_up(C_out, 8))
    TM = min(1024, _round_up(M, 128))
    TK = _round_up(K, 8) if K <= 1024 else 512
    Cop = _round_up(C_out, TCo)
    Mp = _round_up(M, TM)
    Kp = _round_up(K, TK)

    p_p = jnp.pad(patches, ((0, Kp - K), (0, Mp - M)))
    w_p = jnp.pad(weight.reshape(C_out, K).astype(jnp.bfloat16),
                  ((0, Cop - C_out), (0, Kp - K)))
    b_p = jnp.pad(bias.astype(jnp.float32).reshape(C_out, 1),
                  ((0, Cop - C_out), (0, 0)))

    grid = (Cop // TCo, Mp // TM, Kp // TK)
    out_p = pl.pallas_call(
        _conv3d_gemm_gelu_kernel,
        out_shape=jax.ShapeDtypeStruct((Cop, Mp), jnp.float32),
        grid_spec=pltpu.PrefetchScalarGridSpec(
            num_scalar_prefetch=0,
            grid=grid,
            in_specs=[
                pl.BlockSpec((TCo, TK), lambda i, j, k: (i, k)),   # weight
                pl.BlockSpec((TK, TM), lambda i, j, k: (k, j)),    # patches
                pl.BlockSpec((TCo, 1), lambda i, j, k: (i, 0)),    # bias
            ],
            out_specs=pl.BlockSpec((TCo, TM), lambda i, j, k: (i, j)),
            scratch_shapes=[pltpu.VMEM((TCo, TM), jnp.float32)],
        ),
        compiler_params=pltpu.CompilerParams(
            dimension_semantics=("parallel", "parallel", "arbitrary")),
    )(w_p, p_p, b_p)

    out = out_p[:C_out, :M].reshape(C_out, N, Do, Ho, Wo)
    return jnp.transpose(out, (1, 0, 2, 3, 4))               # NCDHW


# -----------------------------------------------------------------------------
# Demo / self-check
# -----------------------------------------------------------------------------
if __name__ == "__main__":
    # Synthetic config (layer_id = 0 => in_channels = 1):
    #   conv_3d_channels = [8], conv_3d_kernel = [(2,3,3)],
    #   conv_3d_stride = [(2,2,2)], conv_bias = True,
    #   feat_extract_activation = "gelu"
    C_in, C_out = 1, 8
    kernel = (2, 3, 3)
    stride = (2, 2, 2)

    key = jax.random.PRNGKey(0)
    kx, kw, kb = jax.random.split(key, 3)

    N, D, H, W = 2, 8, 16, 16
    x = jax.random.normal(kx, (N, C_in, D, H, W), jnp.float32)

    # Deterministic param init (Kaiming-uniform-ish, like nn.Conv3d default).
    fan_in = C_in * kernel[0] * kernel[1] * kernel[2]
    bound = 1.0 / math.sqrt(fan_in)
    weight = jax.random.uniform(kw, (C_out, C_in, *kernel), jnp.float32,
                                minval=-bound, maxval=bound)
    bias = jax.random.uniform(kb, (C_out,), jnp.float32,
                              minval=-bound, maxval=bound)

    out = sign2vec_conv_layer_forward(x, weight, bias,
                                      kernel=kernel, stride=stride)
    out = jax.block_until_ready(out)

    Do = (D - kernel[0]) // stride[0] + 1
    Ho = (H - kernel[1]) // stride[1] + 1
    Wo = (W - kernel[2]) // stride[2] + 1

    # Reference 1 (tight): same bf16-rounded operands through XLA conv + exact
    # GELU — checks the Pallas GEMM/bias/GELU path itself.
    xr = x.astype(jnp.bfloat16).astype(jnp.float32)
    wr = weight.astype(jnp.bfloat16).astype(jnp.float32)
    ref = lax.conv_general_dilated(
        xr, wr, window_strides=stride, padding="VALID",
        dimension_numbers=("NCDHW", "OIDHW", "NCDHW"))
    ref = jax.nn.gelu(ref + bias.reshape(1, C_out, 1, 1, 1), approximate=False)
    assert out.shape == ref.shape == (N, C_out, Do, Ho, Wo), out.shape
    assert jnp.allclose(out, ref, atol=1e-3, rtol=1e-3), \
        float(jnp.max(jnp.abs(out - ref)))

    # Reference 2 (loose): full-f32 PyTorch-equivalent path — the only
    # difference is the intentional bf16 operand cast in the fast path.
    ref32 = lax.conv_general_dilated(
        x, weight, window_strides=stride, padding="VALID",
        dimension_numbers=("NCDHW", "OIDHW", "NCDHW"))
    ref32 = jax.nn.gelu(ref32 + bias.reshape(1, C_out, 1, 1, 1),
                        approximate=False)
    assert jnp.allclose(out, ref32, atol=5e-2, rtol=5e-2), \
        float(jnp.max(jnp.abs(out - ref32)))

    print("KERNEL_OK")
</pallas_src>

<mosaic_0001>
module attributes {stable_mosaic.version = 11 : i64} {
  func.func @_conv3d_gemm_gelu_kernel(%arg0: i32, %arg1: i32, %arg2: i32, %arg3: memref<8x24xbf16, #tpu.memory_space<vmem>>, %arg4: memref<24x512xbf16, #tpu.memory_space<vmem>>, %arg5: memref<8x1xf32, #tpu.memory_space<vmem>>, %arg6: memref<8x512xf32, #tpu.memory_space<vmem>>, %arg7: memref<8x512xf32, #tpu.memory_space<vmem>>) attributes {dimension_semantics = [#tpu.dimension_semantics<parallel>, #tpu.dimension_semantics<parallel>, #tpu.dimension_semantics<arbitrary>], iteration_bounds = array<i64: 1, 1, 1>, scalar_prefetch = 0 : i64, scratch_operands = 1 : i64, tpu.core_type = #tpu.core_type<tc>, window_params = [{transform_indices = @transform_0, window_bounds = array<i64: 8, 24>}, {transform_indices = @transform_1, window_bounds = array<i64: 24, 512>}, {transform_indices = @transform_2, window_bounds = array<i64: 8, 1>}, {transform_indices = @transform_3, window_bounds = array<i64: 8, 512>}]} {
    %c0_i32 = arith.constant 0 : i32
    %0 = arith.cmpi eq, %arg2, %c0_i32 : i32
    %1 = arith.extui %0 : i1 to i32
    %c0_i32_0 = arith.constant 0 : i32
    %2 = arith.cmpi ne, %1, %c0_i32_0 : i32
    scf.if %2 {
      %cst_10 = arith.constant 0.000000e+00 : f32
      %12 = vector.broadcast %cst_10 : f32 to vector<8x512xf32>
      %c0_11 = arith.constant 0 : index
      %c0_12 = arith.constant 0 : index
      %13 = vector.load %arg7[%c0_11, %c0_12] : memref<8x512xf32, #tpu.memory_space<vmem>>, vector<8x512xf32>
      tpu.vector_store %arg7[%c0_11, %c0_12], %12 {strides = array<i32>} : memref<8x512xf32, #tpu.memory_space<vmem>>, vector<8x512xf32>,
    } else {
    }
    %c0 = arith.constant 0 : index
    %c0_1 = arith.constant 0 : index
    %3 = vector.load %arg7[%c0, %c0_1] : memref<8x512xf32, #tpu.memory_space<vmem>>, vector<8x512xf32>
    %c0_2 = arith.constant 0 : index
    %c0_3 = arith.constant 0 : index
    %4 = vector.load %arg3[%c0_2, %c0_3] : memref<8x24xbf16, #tpu.memory_space<vmem>>, vector<8x24xbf16>
    %c0_4 = arith.constant 0 : index
    %c0_5 = arith.constant 0 : index
    %5 = vector.load %arg4[%c0_4, %c0_5] : memref<24x512xbf16, #tpu.memory_space<vmem>>, vector<24x512xbf16>
    %cst = arith.constant dense<0.000000e+00> : vector<8x512xf32>
    %6 = tpu.matmul %4, %5, %cst {dimension_numbers = #tpu.dot_dimension_numbers<[1], [0], [0], [1], [0, 0, 1, 1], [], []>} : vector<8x24xbf16>, vector<24x512xbf16>, vector<8x512xf32> -> vector<8x512xf32>
    %7 = arith.addf %3, %6 : vector<8x512xf32>
    %c0_6 = arith.constant 0 : index
    %c0_7 = arith.constant 0 : index
    %8 = vector.load %arg7[%c0_6, %c0_7] : memref<8x512xf32, #tpu.memory_space<vmem>>, vector<8x512xf32>
    tpu.vector_store %arg7[%c0_6, %c0_7], %7 {strides = array<i32>} : memref<8x512xf32, #tpu.memory_space<vmem>>, vector<8x512xf32>,
    %c0_i32_8 = arith.constant 0 : i32
    %9 = arith.cmpi eq, %arg2, %c0_i32_8 : i32
    %10 = arith.extui %9 : i1 to i32
    %c0_i32_9 = arith.constant 0 : i32
    %11 = arith.cmpi ne, %10, %c0_i32_9 : i32
    scf.if %11 {
      %c0_10 = arith.constant 0 : index
      %c0_11 = arith.constant 0 : index
      %12 = vector.load %arg7[%c0_10, %c0_11] : memref<8x512xf32, #tpu.memory_space<vmem>>, vector<8x512xf32>
      %c0_12 = arith.constant 0 : index
      %c0_13 = arith.constant 0 : index
      %13 = vector.load %arg5[%c0_12, %c0_13] : memref<8x1xf32, #tpu.memory_space<vmem>>, vector<8x1xf32>
      %14 = vector.broadcast %13 : vector<8x1xf32> to vector<8x512xf32>
      %15 = arith.addf %12, %14 : vector<8x512xf32>
      %cst_14 = arith.constant 5.000000e-01 : f32
      %16 = vector.broadcast %cst_14 : f32 to vector<8x512xf32>
      %17 = arith.mulf %16, %15 : vector<8x512xf32>
      %cst_15 = arith.constant 0.707106769 : f32
      %18 = vector.broadcast %cst_15 : f32 to vector<8x512xf32>
      %19 = arith.mulf %15, %18 : vector<8x512xf32>
      %20 = math.erf %19 : vector<8x512xf32>
      %cst_16 = arith.constant 1.000000e+00 : f32
      %21 = vector.broadcast %cst_16 : f32 to vector<8x512xf32>
      %22 = arith.addf %21, %20 : vector<8x512xf32>
      %23 = arith.mulf %17, %22 : vector<8x512xf32>
      %c0_17 = arith.constant 0 : index
      %c0_18 = arith.constant 0 : index
      %24 = vector.load %arg6[%c0_17, %c0_18] : memref<8x512xf32, #tpu.memory_space<vmem>>, vector<8x512xf32>
      tpu.vector_store %arg6[%c0_17, %c0_18], %23 {strides = array<i32>} : memref<8x512xf32, #tpu.memory_space<vmem>>, vector<8x512xf32>,
    } else {
    }
    return
  }
  func.func @transform_0(%arg0: i32, %arg1: i32, %arg2: i32) -> (i32, i32) {
    %c0_i32 = arith.constant 0 : i32
    return %arg0, %arg2 : i32, i32
  }
  func.func @transform_1(%arg0: i32, %arg1: i32, %arg2: i32) -> (i32, i32) {
    %c0_i32 = arith.constant 0 : i32
    return %arg2, %arg1 : i32, i32
  }
  func.func @transform_2(%arg0: i32, %arg1: i32, %arg2: i32) -> (i32, i32) {
    %c0_i32 = arith.constant 0 : i32
    %c0_i32_0 = arith.constant 0 : i32
    return %arg0, %c0_i32 : i32, i32
  }
  func.func @transform_3(%arg0: i32, %arg1: i32, %arg2: i32) -> (i32, i32) {
    %c0_i32 = arith.constant 0 : i32
    return %arg0, %arg1 : i32, i32
  }
}

</mosaic_0001>

<llo_original>
// kernel: sign2vec_conv_layer_forward.1
$region0: #{sign2vec_conv_layer_forward.1}
  #allocation0 [shape = 'u32[]', space=smem, size = 0x4, offset = 0x4, fixed_abs, tag = 'smem constant byte address 0x4 - core index']
  #allocation1 [shape = 'u32[144,128]{1,0:T(1,128)}', space=vmem, size = 0x12000, scoped, tag = 'internal scratch']
  #allocation2 [shape = 'f32[8,512]{1,0:T(8,128)}', space=vmem, size = 0x4000, scoped, tag = 'scratch operand']
  %s0 = inlined_call_operand.vmem [shape: bf16[8,24], index: 0, kind: input, shape index: {}]
  %s1 = inlined_call_operand.vmem [shape: bf16[24,512], index: 1, kind: input, shape index: {}]
  %s2 = inlined_call_operand.vmem [shape: f32[8,1], index: 2, kind: input, shape index: {}]
  %s3 = inlined_call_operand.vmem [shape: f32[8,512], index: 3, kind: output, shape index: {}]
  %s4 = sld [smem:[#allocation0]]
  $region30: #{sign2vec_conv_layer_forward.1} parent=0
    _
  %s6 = ssub.s32 1, %s4
  %s7 = scalar_select 0, %s6, %s4
  // Predicated region
  $region2: #{sign2vec_conv_layer_forward.1} parent=0 // pred_check
    _
  $region3: #{sign2vec_conv_layer_forward.1} parent=0 // pred_check_branch
    %9 = sbr.rel (0) target = $region5
  $region4: #{sign2vec_conv_layer_forward.1} parent=0 // pred_region
    _
  $region5: #{sign2vec_conv_layer_forward.1} parent=0 // pred_fallthru
    _
  // Predicated region
  $region6: #{sign2vec_conv_layer_forward.1} parent=0 // pred_check
    _
  $region7: #{sign2vec_conv_layer_forward.1} parent=0 // pred_check_branch
    %11 = sbr.rel (0) target = $region9
  $region8: #{sign2vec_conv_layer_forward.1} parent=0 // pred_region
    _
  $region9: #{sign2vec_conv_layer_forward.1} parent=0 // pred_fallthru
    _
  // Predicated region
  $region10: #{sign2vec_conv_layer_forward.1} parent=0 // pred_check
    _
  $region11: #{sign2vec_conv_layer_forward.1} parent=0 // pred_check_branch
    %13 = sbr.rel (0) target = $region13
  $region12: #{sign2vec_conv_layer_forward.1} parent=0 // pred_region
    _
  $region13: #{sign2vec_conv_layer_forward.1} parent=0 // pred_fallthru
    _
  %p15 = scmp.eq.s32.totalorder 0, 0
  // Predicated region
  $region14: #{sign2vec_conv_layer_forward.1} parent=0 // pred_check
    %p16 = pneg %p15
  $region15: #{sign2vec_conv_layer_forward.1} parent=0 // pred_check_branch
    %18 = sbr.rel (%p16) target = $region17
  $region16: #{sign2vec_conv_layer_forward.1} parent=0 // pred_region
    %19 = vst [vmem:[#allocation2] sm:$0xff] 0.0
    %20 = vst [vmem:[#allocation2 + $0x8] sm:$0xff] 0.0
    %21 = vst [vmem:[#allocation2 + $0x10] sm:$0xff] 0.0
    %22 = vst [vmem:[#allocation2 + $0x18] sm:$0xff] 0.0
  $region17: #{sign2vec_conv_layer_forward.1} parent=0 // pred_fallthru
    _
  %v23 = vld [vmem:[#allocation2] sm:$0xff]
  %v24 = vld [vmem:[#allocation2 + $0x8] sm:$0xff]
  %v25 = vld [vmem:[#allocation2 + $0x10] sm:$0xff]
  %v26 = vld [vmem:[#allocation2 + $0x18] sm:$0xff]
  %v27 = vld [vmem:[%s0] sm:$0xf]
  %v28 = vld [vmem:[%s1] sm:$0xff]
  %v29 = vld [vmem:[%s1 + $0x8] sm:$0xff]
  %v30 = vld [vmem:[%s1 + $0x10] sm:$0xff]
  %v31 = vld [vmem:[%s1 + $0x18] sm:$0xff]
  %v32 = vld [vmem:[%s1 + $0x20] sm:$0xff]
  %v33 = vld [vmem:[%s1 + $0x28] sm:$0xff]
  %v40 = vunpack.c.l.b16 %v28
  %v41 = vunpack.c.h.b16 %v28
  %v42 = vunpack.c.l.b16 %v29
  %v43 = vunpack.c.h.b16 %v29
  %v44 = vunpack.c.l.b16 %v30
  %v45 = vunpack.c.h.b16 %v30
  %v46 = vunpack.c.l.b16 %v31
  %v47 = vunpack.c.h.b16 %v31
  %v48 = vunpack.c.l.b16 %v32
  %v49 = vunpack.c.h.b16 %v32
  %v50 = vunpack.c.l.b16 %v33
  %v51 = vunpack.c.h.b16 %v33
  %v52 = vpack.c.b16 %v44, %v40
  %v53 = vpack.c.b16 %v45, %v41
  %v54 = vpack.c.b16 %v46, %v42
  %v55 = vpack.c.b16 %v47, %v43
  %v56 = vpack.c.b16 %v48, %v48
  %v57 = vpack.c.b16 %v49, %v49
  %v58 = vpack.c.b16 %v50, %v50
  %v59 = vpack.c.b16 %v51, %v51
  %vm64 = vcmask 195584
  %v66 = vsel %vm64, %v27, 0
  %vm68 = vcmask 1043456
  %v70 = vsel %vm68, %v56, 0
  %v73 = vsel %vm68, %v57, 0
  %v76 = vsel %vm68, %v58, 0
  %v79 = vsel %vm68, %v59, 0
  %81 = vmatprep.subr.bf16.mxu0 %v53
  %82 = vmatpush1.bf16.msra.mxu0 %v52
  %83 = vmatprep.subr.bf16.mxu0 %v73
  %84 = vmatpush1.bf16.msra.mxu0 %v70
  %85 = vmatprep.subr.bf16.mxu0 0
  %86 = vmatpush1.bf16.msra.mxu0 0
  %87 = vmatprep.subr.bf16.mxu0 0
  %88 = vmatpush1.bf16.msra.mxu0 0
  %89 = vmatprep.subr.bf16.mxu0 0
  %90 = vmatpush1.bf16.msra.mxu0 0
  %91 = vmatprep.subr.bf16.mxu0 0
  %92 = vmatpush1.bf16.msra.mxu0 0
  %93 = vmatprep.subr.bf16.mxu0 0
  %94 = vmatpush1.bf16.msra.mxu0 0
  %95 = vmatprep.subr.bf16.mxu0 0
  %96 = vmatpush1.bf16.msra.mxu0 0
  %97 = vmatprep.subr.bf16.mxu0 0
  %98 = vmatpush1.bf16.msra.mxu0 0
  %99 = vmatprep.subr.bf16.mxu0 0
  %100 = vmatpush1.bf16.msra.mxu0 0
  %101 = vmatprep.subr.bf16.mxu0 0
  %102 = vmatpush1.bf16.msra.mxu0 0
  %103 = vmatprep.subr.bf16.mxu0 0
  %104 = vmatpush1.bf16.msra.mxu0 0
  %105 = vmatprep.subr.bf16.mxu0 0
  %106 = vmatpush1.bf16.msra.mxu0 0
  %107 = vmatprep.subr.bf16.mxu0 0
  %108 = vmatpush1.bf16.msra.mxu0 0
  %109 = vmatprep.subr.bf16.mxu0 0
  %110 = vmatpush1.bf16.msra.mxu0 0
  %111 = vmatprep.subr.bf16.mxu0 0
  %112 = vmatpush1.bf16.msra.mxu0 0
  %113 = vmatprep.mubr.bf16.mxu0 0
  %114 = vmatmul.mubr.bf16.gmra.mrb[0].mxu0 %v66
  %v115 = vpop.f32.mrb[0].mxu0
  %v116 = vadd.f32 0.0, %v115
  %v117 = vpop.f32.mrb[0].mxu0
  %v118 = vadd.f32 0.0, %v117
  %v119 = vpop.f32.mrb[0].mxu0
  %v120 = vpop.f32.mrb[0].mxu0
  %121 = vdwg.mxu0
  %122 = vmatprep.subr.bf16.mxu0 %v55
  %123 = vmatpush1.bf16.msra.mxu0 %v54
  %124 = vmatprep.subr.bf16.mxu0 %v79
  %125 = vmatpush1.bf16.msra.mxu0 %v76
  %126 = vmatprep.subr.bf16.mxu0 0
  %127 = vmatpush1.bf16.msra.mxu0 0
  %128 = vmatprep.subr.bf16.mxu0 0
  %129 = vmatpush1.bf16.msra.mxu0 0
  %130 = vmatprep.subr.bf16.mxu0 0
  %131 = vmatpush1.bf16.msra.mxu0 0
  %132 = vmatprep.subr.bf16.mxu0 0
  %133 = vmatpush1.bf16.msra.mxu0 0
  %134 = vmatprep.subr.bf16.mxu0 0
  %135 = vmatpush1.bf16.msra.mxu0 0
  %136 = vmatprep.subr.bf16.mxu0 0
  %137 = vmatpush1.bf16.msra.mxu0 0
  %138 = vmatprep.subr.bf16.mxu0 0
  %139 = vmatpush1.bf16.msra.mxu0 0
  %140 = vmatprep.subr.bf16.mxu0 0
  %141 = vmatpush1.bf16.msra.mxu0 0
  %142 = vmatprep.subr.bf16.mxu0 0
  %143 = vmatpush1.bf16.msra.mxu0 0
  %144 = vmatprep.subr.bf16.mxu0 0
  %145 = vmatpush1.bf16.msra.mxu0 0
  %146 = vmatprep.subr.bf16.mxu0 0
  %147 = vmatpush1.bf16.msra.mxu0 0
  %148 = vmatprep.subr.bf16.mxu0 0
  %149 = vmatpush1.bf16.msra.mxu0 0
  %150 = vmatprep.subr.bf16.mxu0 0
  %151 = vmatpush1.bf16.msra.mxu0 0
  %152 = vmatprep.subr.bf16.mxu0 0
  %153 = vmatpush1.bf16.msra.mxu0 0
  %154 = vmatprep.mubr.bf16.mxu0 0
  %155 = vmatmul.mubr.bf16.gmra.mrb[0].mxu0 %v66
  %v156 = vpop.f32.mrb[0].mxu0
  %v157 = vadd.f32 0.0, %v156
  %v158 = vpop.f32.mrb[0].mxu0
  %v159 = vadd.f32 0.0, %v158
  %v160 = vpop.f32.mrb[0].mxu0
  %v161 = vpop.f32.mrb[0].mxu0
  %162 = vdwg.mxu0
  %v163 = vadd.f32 %v23, %v116
  %v164 = vadd.f32 %v24, %v118
  %v165 = vadd.f32 %v25, %v157
  %v166 = vadd.f32 %v26, %v159
  %167 = vst [vmem:[#allocation2] sm:$0xff] %v163
  %168 = vst [vmem:[#allocation2 + $0x8] sm:$0xff] %v164
  %169 = vst [vmem:[#allocation2 + $0x10] sm:$0xff] %v165
  %170 = vst [vmem:[#allocation2 + $0x18] sm:$0xff] %v166
  // Predicated region
  $region18: #{sign2vec_conv_layer_forward.1} parent=0 // pred_check
    %p171 = pneg %p15
  $region19: #{sign2vec_conv_layer_forward.1} parent=0 // pred_check_branch
    %173 = sbr.rel (%p171) target = $region21
  $region20: #{sign2vec_conv_layer_forward.1} parent=0 // pred_region
    %v174 = vld [vmem:[#allocation2] sm:$0xff]
    %v175 = vld [vmem:[#allocation2 + $0x8] sm:$0xff]
    %v176 = vld [vmem:[#allocation2 + $0x10] sm:$0xff]
    %v177 = vld [vmem:[#allocation2 + $0x18] sm:$0xff]
    %v178 = vld [vmem:[%s2] sm:$0xff]
    %180 = vset.pattern.permute.xlu0 0
    %181 = vperm.xlu0 %180, %v178
    %v182 = vpop.permute.xlu0 %181
    %v184 = vadd.f32 %v174, %v182
    %v185 = vadd.f32 %v175, %v182
    %v186 = vadd.f32 %v176, %v182
    %v187 = vadd.f32 %v177, %v182
    %v188 = vmul.f32 %v184, 0.5
    %v189 = vmul.f32 %v185, 0.5
    %v190 = vmul.f32 %v186, 0.5
    %v191 = vmul.f32 %v187, 0.5
    %v192 = vmul.f32 %v184, 0.70710677
    %v193 = vmul.f32 %v185, 0.70710677
    %v194 = vmul.f32 %v186, 0.70710677
    %v195 = vmul.f32 %v187, 0.70710677
    %v196 = verf.f32.pop %v192
    %v197 = verf.f32.pop %v193
    %v198 = verf.f32.pop %v194
    %v199 = verf.f32.pop %v195
    %v200 = vadd.f32 %v196, 1.0
    %v201 = vadd.f32 %v197, 1.0
    %v202 = vadd.f32 %v198, 1.0
    %v203 = vadd.f32 %v199, 1.0
    %v204 = vmul.f32 %v188, %v200
    %v205 = vmul.f32 %v189, %v201
    %v206 = vmul.f32 %v190, %v202
    %v207 = vmul.f32 %v191, %v203
    %208 = vst [vmem:[%s3] sm:$0xff] %v204
    %209 = vst [vmem:[%s3 + $0x8] sm:$0xff] %v205
    %210 = vst [vmem:[%s3 + $0x10] sm:$0xff] %v206
    %211 = vst [vmem:[%s3 + $0x18] sm:$0xff] %v207
  $region21: #{sign2vec_conv_layer_forward.1} parent=0 // pred_fallthru
    _
  // Predicated region
  $region22: #{sign2vec_conv_layer_forward.1} parent=0 // pred_check
    _
  $region23: #{sign2vec_conv_layer_forward.1} parent=0 // pred_check_branch
    %213 = sbr.rel (0) target = $region25
  $region24: #{sign2vec_conv_layer_forward.1} parent=0 // pred_region
    _
  $region25: #{sign2vec_conv_layer_forward.1} parent=0 // pred_fallthru
    _
  // Predicated region
  $region26: #{sign2vec_conv_layer_forward.1} parent=0 // pred_check
    _
  $region27: #{sign2vec_conv_layer_forward.1} parent=0 // pred_check_branch
    %215 = sbr.rel (0) target = $region29
  $region28: #{sign2vec_conv_layer_forward.1} parent=0 // pred_region
    _
  $region29: #{sign2vec_conv_layer_forward.1} parent=0 // pred_fallthru
    _

</llo_original>
